<compile_context>
chip_gen: v6e
topology: v6e:2x2x1
jax: 0.10.0
libtpu: 0.0.40
codegen_flags: <defaults>
</compile_context>

<pallas_src>
import numpy as np
import jax
import jax.numpy as jnp
from jax import lax
from jax.experimental import pallas as pl
from jax.experimental.pallas import tpu as pltpu

LANE = 128
MXU_DTYPE = jnp.bfloat16        # MXU operands (f32 accumulation everywhere)
ACT_DTYPE = jnp.bfloat16        # inter-kernel activation storage
VMEM_LIMIT_BYTES = 64 * 1024 * 1024


def _round_up(n, m=LANE):
    return ((n + m - 1) // m) * m


def _cparams():
    return pltpu.CompilerParams(dimension_semantics=("parallel",),
                                vmem_limit_bytes=VMEM_LIMIT_BYTES)


def _pick_block_batch(batch, seq, max_rows=1024):
    """Largest per-step batch count dividing `batch` that keeps >=2 grid
    steps (both v7x TensorCores busy) and bounds rows per step."""
    best = 1
    for bt in range(1, batch + 1):
        if batch % bt:
            continue
        if bt * seq > max(max_rows, seq):
            continue
        if batch // bt >= 2:
            best = bt
    return best


# ---------------------------------------------------------------------------
# In-kernel helpers
# ---------------------------------------------------------------------------

def _layernorm_rows(x, g, b, lmask, d_real, eps=1e-5):
    """LayerNorm over the first `d_real` lanes of a zero-padded (R, Dpad) f32
    array.  Padded lanes of x are exactly zero, so the mean needs no mask;
    the variance masks (x-mu) on padded lanes.  gamma/beta are zero there."""
    mu = jnp.sum(x, axis=-1, keepdims=True) * (1.0 / d_real)
    xc = x - mu
    sq = xc * xc
    if lmask is not None:
        sq = sq * lmask
    var = jnp.sum(sq, axis=-1, keepdims=True) * (1.0 / d_real)
    return xc * lax.rsqrt(var + eps) * g + b


def _lane_mask(dpad, d_real):
    if d_real == dpad:
        return None
    lane = lax.broadcasted_iota(jnp.int32, (1, dpad), 1)
    return (lane < d_real).astype(jnp.float32)


# ---------------------------------------------------------------------------
# Fused kernels
# ---------------------------------------------------------------------------

def patch_embed_pallas(patches, w, posb, cls0, block_batch):
    """Patch-embed matmul fused with (+bias+pos) and cls-token prepend.

    patches: (B, N, K) f32;  w: (K, Dp) bf16;  posb: (N, Dp) f32 (pos+bias);
    cls0: (1, Dp) f32 (cls_token + pos[0]).   Returns (B, N+1, Dp) ACT_DTYPE.
    """
    B, N, K = patches.shape
    Dp = w.shape[1]
    Bt = block_batch
    rows = Bt * N

    def kernel(p_ref, w_ref, posb_ref, cls0_ref, o_ref):
        pv = p_ref[...].reshape(rows, K)
        tok = jnp.dot(pv.astype(w_ref.dtype), w_ref[...],
                      preferred_element_type=jnp.float32)
        tok = tok.reshape(Bt, N, Dp) + posb_ref[...]
        o_ref[:, 1:, :] = tok.astype(o_ref.dtype)
        o_ref[:, 0:1, :] = jnp.broadcast_to(cls0_ref[...],
                                            (Bt, 1, Dp)).astype(o_ref.dtype)

    return pl.pallas_call(
        kernel,
        out_shape=jax.ShapeDtypeStruct((B, N + 1, Dp), ACT_DTYPE),
        grid=(B // Bt,),
        in_specs=[
            pl.BlockSpec((Bt, N, K), lambda i: (i, 0, 0)),
            pl.BlockSpec(w.shape, lambda i: (0, 0)),
            pl.BlockSpec(posb.shape, lambda i: (0, 0)),
            pl.BlockSpec(cls0.shape, lambda i: (0, 0)),
        ],
        out_specs=pl.BlockSpec((Bt, N + 1, Dp), lambda i: (i, 0, 0)),
        compiler_params=_cparams(),
    )(patches, w, posb, cls0)


def transformer_block_pallas(x, p, num_heads, d_real, block_batch):
    """One pre-norm transformer block fused into a single pallas_call.

    x: (B, S, Dpad), zero on padded lanes.  LN1 -> QKV -> batched per-head
    attention (128-lane head slots, scratch accumulator) -> proj + residual
    -> LN2 -> MLP(GELU) + residual, all in VMEM.
    """
    B, S, Dp = x.shape
    Bt = block_batch
    assert B % Bt == 0
    assert d_real % num_heads == 0
    hd = d_real // num_heads
    assert hd <= LANE
    da = num_heads * LANE                       # head-slot attention width
    scale = float(hd) ** -0.5
    rows = Bt * S

    def kernel(x_ref, g1_ref, b1_ref, wqkv_ref, wp_ref, bp_ref,
               g2_ref, b2_ref, w1_ref, bb1_ref, w2_ref, bb2_ref,
               o_ref, attn_ref):
        xv = x_ref[...].astype(jnp.float32).reshape(rows, Dp)
        lmask = _lane_mask(Dp, d_real)          # computed once, reused by both LNs

        # ---------------- attention branch ----------------
        h = _layernorm_rows(xv, g1_ref[...], b1_ref[...], lmask, d_real)
        qkv = jnp.dot(h.astype(wqkv_ref.dtype), wqkv_ref[...],
                      preferred_element_type=jnp.float32)        # (rows, 3*da)
        for hh in range(num_heads):                              # aligned slots
            qo = hh * LANE
            q = (qkv[:, qo:qo + LANE] * scale)                   # scale folded into q
            q = q.reshape(Bt, S, LANE).astype(MXU_DTYPE)
            k = qkv[:, da + qo:da + qo + LANE].reshape(Bt, S, LANE).astype(MXU_DTYPE)
            v = qkv[:, 2 * da + qo:2 * da + qo + LANE].reshape(Bt, S, LANE).astype(MXU_DTYPE)
            s = jnp.einsum('bqd,bkd->bqk', q, k,
                           preferred_element_type=jnp.float32)   # (Bt, S, S)
            s = s - jnp.max(s, axis=-1, keepdims=True)
            pr = jnp.exp(s)
            pr = pr * pl.reciprocal(jnp.sum(pr, axis=-1, keepdims=True),
                                    approx=True)
            o = jnp.einsum('bqk,bkd->bqd', pr.astype(MXU_DTYPE), v,
                           preferred_element_type=jnp.float32)   # (Bt, S, LANE)
            attn_ref[:, qo:qo + LANE] = o.reshape(rows, LANE).astype(attn_ref.dtype)

        xv = xv + jnp.dot(attn_ref[...], wp_ref[...],
                          preferred_element_type=jnp.float32) + bp_ref[...]

        # ---------------- MLP branch ----------------
        h2 = _layernorm_rows(xv, g2_ref[...], b2_ref[...], lmask, d_real)
        m = jnp.dot(h2.astype(w1_ref.dtype), w1_ref[...],
                    preferred_element_type=jnp.float32) + bb1_ref[...]
        m = jax.nn.gelu(m, approximate=False)                    # nn.GELU default
        xv = xv + jnp.dot(m.astype(w2_ref.dtype), w2_ref[...],
                          preferred_element_type=jnp.float32) + bb2_ref[...]

        o_ref[...] = xv.reshape(Bt, S, Dp).astype(o_ref.dtype)

    weight_names = ["ln1_g", "ln1_b", "qkv_w", "proj_w", "proj_b",
                    "ln2_g", "ln2_b", "fc1_w", "fc1_b", "fc2_w", "fc2_b"]
    wspecs = [pl.BlockSpec(p[name].shape, lambda i: (0, 0))
              for name in weight_names]                          # VMEM-resident

    return pl.pallas_call(
        kernel,
        out_shape=jax.ShapeDtypeStruct((B, S, Dp), ACT_DTYPE),
        grid=(B // Bt,),
        in_specs=[pl.BlockSpec((Bt, S, Dp), lambda i: (i, 0, 0))] + wspecs,
        out_specs=pl.BlockSpec((Bt, S, Dp), lambda i: (i, 0, 0)),
        scratch_shapes=[pltpu.VMEM((rows, da), MXU_DTYPE)],      # head-slot acc
        compiler_params=_cparams(),
    )(x, *[p[name] for name in weight_names])


def ln_linear_pallas(x, g, b, w, bias, d_real, block_batch,
                     out_dtype=jnp.float32):
    """Fused LayerNorm (over first d_real lanes) + matmul (+ optional bias)."""
    B, S, Dp = x.shape
    Nout = w.shape[1]
    Bt = block_batch
    assert B % Bt == 0
    rows = Bt * S
    has_bias = bias is not None

    def kernel(x_ref, g_ref, b_ref, w_ref, *rest):
        if has_bias:
            bias_ref, o_ref = rest
        else:
            (o_ref,) = rest
        xv = x_ref[...].astype(jnp.float32).reshape(rows, Dp)
        lmask = _lane_mask(Dp, d_real)
        h = _layernorm_rows(xv, g_ref[...], b_ref[...], lmask, d_real)
        y = jnp.dot(h.astype(w_ref.dtype), w_ref[...],
                    preferred_element_type=jnp.float32)
        if has_bias:
            y = y + bias_ref[...]
        o_ref[...] = y.reshape(Bt, S, Nout).astype(o_ref.dtype)

    in_specs = [
        pl.BlockSpec((Bt, S, Dp), lambda i: (i, 0, 0)),
        pl.BlockSpec(g.shape, lambda i: (0, 0)),
        pl.BlockSpec(b.shape, lambda i: (0, 0)),
        pl.BlockSpec(w.shape, lambda i: (0, 0)),
    ]
    args = [x, g, b, w]
    if has_bias:
        in_specs.append(pl.BlockSpec(bias.shape, lambda i: (0, 0)))
        args.append(bias)

    return pl.pallas_call(
        kernel,
        out_shape=jax.ShapeDtypeStruct((B, S, Nout), out_dtype),
        grid=(B // Bt,),
        in_specs=in_specs,
        out_specs=pl.BlockSpec((Bt, S, Nout), lambda i: (i, 0, 0)),
        compiler_params=_cparams(),
    )(*args)


# ---------------------------------------------------------------------------
# Parameters (padded / packed to lane-dense layouts at the model boundary)
# ---------------------------------------------------------------------------

def get_sinusoid_encoding_table(n_position, d_hid):
    pos = np.arange(n_position, dtype=np.float64)[:, None]
    idx = np.arange(d_hid)[None, :]
    angle = pos / np.power(10000.0, 2.0 * (idx // 2) / d_hid)
    table = np.zeros((n_position, d_hid), dtype=np.float64)
    table[:, 0::2] = np.sin(angle[:, 0::2])
    table[:, 1::2] = np.cos(angle[:, 1::2])
    return np.asarray(table, dtype=np.float32)                   # (n, d)


def _w(key, shape):
    return jax.random.normal(key, shape, jnp.float32) * 0.02


def _pad2(a, rows, cols, dtype):
    a = np.asarray(a, np.float32)
    out = np.zeros((rows, cols), np.float32)
    out[:a.shape[0], :a.shape[1]] = a
    return jnp.asarray(out, dtype)


def make_block_params(key, dim, num_heads, mlp_ratio):
    dp = _round_up(dim)
    hd = dim // num_heads
    da = num_heads * LANE                       # attention head-slot width
    hid = int(dim * mlp_ratio)
    hp = _round_up(hid)
    ks = jax.random.split(key, 4)

    # fused qkv weight (qkv_bias=False); each head packed into its own
    # 128-lane slot: q|k|v sections of width da, head h at lanes [h*128, ...).
    qkv_raw = np.asarray(_w(ks[0], (dim, 3 * dim)))
    qkv = np.zeros((dp, 3 * da), np.float32)
    for s in range(3):
        for h in range(num_heads):
            qkv[:dim, s * da + h * LANE:s * da + h * LANE + hd] = \
                qkv_raw[:, s * dim + h * hd:s * dim + (h + 1) * hd]

    # projection weight rows follow the same head-slot layout.
    proj_raw = np.asarray(_w(ks[1], (dim, dim)))
    proj = np.zeros((da, dp), np.float32)
    for h in range(num_heads):
        proj[h * LANE:h * LANE + hd, :dim] = proj_raw[h * hd:(h + 1) * hd, :]

    return {
        "ln1_g": _pad2(np.ones((1, dim), np.float32), 1, dp, jnp.float32),
        "ln1_b": jnp.zeros((1, dp), jnp.float32),
        "qkv_w": jnp.asarray(qkv, MXU_DTYPE),
        "proj_w": jnp.asarray(proj, MXU_DTYPE),
        "proj_b": jnp.zeros((1, dp), jnp.float32),
        "ln2_g": _pad2(np.ones((1, dim), np.float32), 1, dp, jnp.float32),
        "ln2_b": jnp.zeros((1, dp), jnp.float32),
        "fc1_w": _pad2(_w(ks[2], (dim, hid)), dp, hp, MXU_DTYPE),
        "fc1_b": jnp.zeros((1, hp), jnp.float32),
        "fc2_w": _pad2(_w(ks[3], (hid, dim)), hp, dp, MXU_DTYPE),
        "fc2_b": jnp.zeros((1, dp), jnp.float32),
    }


def init_params(key, cfg):
    ks = jax.random.split(key, 8)
    ps, C = cfg["patch_size"], cfg["in_chans"]
    De, Dd = cfg["enc_dim"], cfg["dec_dim"]
    Dpe, Dpd = _round_up(De), _round_up(Dd)
    N = cfg["num_patches"]
    nc = cfg["dec_num_classes"]
    ncp = _round_up(nc)

    enc_blocks = [make_block_params(k, De, cfg["enc_heads"], cfg["mlp_ratio"])
                  for k in jax.random.split(ks[0], cfg["enc_depth"])]
    dec_blocks = [make_block_params(k, Dd, cfg["dec_heads"], cfg["mlp_ratio"])
                  for k in jax.random.split(ks[1], cfg["dec_depth"])]

    enc_pos = get_sinusoid_encoding_table(N + 1, De)             # fixed sinusoidal
    cls_raw = np.asarray(_w(ks[3], (1, De)))
    patch_bias = np.zeros((1, De), np.float32)                   # conv bias

    return {
        # PatchEmbed Conv2d(in, De, kernel=stride=ps) flattened to (C*ps*ps, De)
        "patch_w": _pad2(_w(ks[2], (C * ps * ps, De)), C * ps * ps, Dpe, MXU_DTYPE),
        # pos[1:] + bias, and cls_token + pos[0], precombined at the host boundary
        "patch_posb": _pad2(enc_pos[1:] + patch_bias, N, Dpe, jnp.float32),
        "cls_pos0": _pad2(cls_raw + enc_pos[0:1], 1, Dpe, jnp.float32),
        "enc_blocks": enc_blocks,
        "enc_norm_g": _pad2(np.ones((1, De), np.float32), 1, Dpe, jnp.float32),
        "enc_norm_b": jnp.zeros((1, Dpe), jnp.float32),
        "enc2dec_w": _pad2(_w(ks[4], (De, Dd)), Dpe, Dpd, MXU_DTYPE),  # bias=False
        "mask_token": _pad2(_w(ks[5], (1, Dd)), 1, Dpd, jnp.float32),
        "dec_pos": _pad2(get_sinusoid_encoding_table(N + 1, Dd), N + 1, Dpd,
                         jnp.float32),
        "dec_blocks": dec_blocks,
        "dec_norm_g": _pad2(np.ones((1, Dd), np.float32), 1, Dpd, jnp.float32),
        "dec_norm_b": jnp.zeros((1, Dpd), jnp.float32),
        # head output padded to a lane-dense multiple of 128; sliced outside
        "head_w": _pad2(_w(ks[6], (Dd, nc)), Dpd, ncp, MXU_DTYPE),
        "head_b": jnp.zeros((1, ncp), jnp.float32),
    }


# ---------------------------------------------------------------------------
# Forward pass (mirrors Pretrain_2D_2D_VisionTransformer.forward)
# ---------------------------------------------------------------------------

def forward(params, x, mask, cfg):
    B_orig, C, T, H, W = x.shape
    ps = cfg["patch_size"]
    nH, nW = H // ps, W // ps
    N = nH * nW
    B = B_orig * T                                  # frames folded into batch
    De, Dd = cfg["enc_dim"], cfg["dec_dim"]
    Dpd = params["dec_pos"].shape[-1]
    nc = cfg["dec_num_classes"]

    # -------- encoder (Masked2DEncoderViT) --------
    frames = x.transpose(0, 2, 1, 3, 4).reshape(B, C, H, W)
    # im2col patch extraction (tiny JAX glue), per-patch features ordered
    # (C, ph, pw) to match Conv2d weight layout.
    patches = frames.reshape(B, C, nH, ps, nW, ps).transpose(0, 2, 4, 1, 3, 5)
    patches = patches.reshape(B, N, C * ps * ps)
    # TODO(synk): im2col gather could be folded into the patch-embed kernel via
    # a (B, nH, nW) index_map; left as one small XLA op at these shapes.
    tok = patch_embed_pallas(patches, params["patch_w"], params["patch_posb"],
                             params["cls_pos0"],
                             _pick_block_batch(B, N + 1))        # (B,N+1,Dpe) bf16

    # visible / masked indices (mask: True == masked; constant count per row).
    # NOTE: trace-time numpy — requires a concrete mask (as in the reference).
    mask2 = np.asarray(mask).reshape(B, N).astype(bool)
    n_msk = int(mask2[0].sum())
    vis_idx = jnp.asarray(np.stack([np.nonzero(~mask2[b])[0] for b in range(B)]))
    msk_idx = jnp.asarray(np.stack([np.nonzero(mask2[b])[0] for b in range(B)]))

    vis_tok = jnp.take_along_axis(tok[:, 1:, :], vis_idx[:, :, None], axis=1)
    x_vis = jnp.concatenate([tok[:, :1, :], vis_tok], axis=1)    # (B,1+Nv,Dpe)

    bt_enc = _pick_block_batch(B, x_vis.shape[1])
    for blk in params["enc_blocks"]:
        x_vis = transformer_block_pallas(x_vis, blk, cfg["enc_heads"], De, bt_enc)

    # encoder head = Identity (encoder_num_classes=0);
    # fused final-norm + encoder_to_decoder (bias-free Linear)
    x_vis = ln_linear_pallas(x_vis, params["enc_norm_g"], params["enc_norm_b"],
                             params["enc2dec_w"], None, De, bt_enc,
                             out_dtype=jnp.float32)              # (B,1+Nv,Dpd)

    # -------- token assembly for the decoder --------
    dec_pos = params["dec_pos"]                                  # (N+1, Dpd)
    x_cls = x_vis[:, :1, :] + dec_pos[None, :1, :]
    pos_patch = jnp.broadcast_to(dec_pos[None, 1:, :], (B, N, Dpd))
    pos_vis = jnp.take_along_axis(pos_patch, vis_idx[:, :, None], axis=1)
    pos_msk = jnp.take_along_axis(pos_patch, msk_idx[:, :, None], axis=1)
    x_full = jnp.concatenate(
        [x_cls, x_vis[:, 1:, :] + pos_vis, params["mask_token"][None] + pos_msk],
        axis=1).astype(ACT_DTYPE)                                # (B,1+N,Dpd)

    # -------- decoder (PretrainVisionTransformerDecoder) --------
    bt_dec = _pick_block_batch(B, x_full.shape[1])
    for blk in params["dec_blocks"]:
        x_full = transformer_block_pallas(x_full, blk, cfg["dec_heads"], Dd, bt_dec)

    y = x_full[:, -n_msk:, :]                      # last return_token_num tokens
    y = ln_linear_pallas(y, params["dec_norm_g"], params["dec_norm_b"],
                         params["head_w"], params["head_b"], Dd,
                         _pick_block_batch(B, n_msk),
                         out_dtype=jnp.float32)                  # (B,n_msk,ncp)
    y = y[..., :nc]                                 # drop lane padding

    return y.reshape(B_orig, -1, nc)


# ---------------------------------------------------------------------------
if __name__ == "__main__":
    cfg = dict(
        img_size=16, patch_size=8, in_chans=3,
        enc_dim=32, enc_depth=2, enc_heads=4,
        dec_dim=16, dec_depth=1, dec_heads=2,
        dec_num_classes=8 * 8 * 3,      # patch_size**2 * in_chans
        mlp_ratio=4.0,
        num_patches=(16 // 8) * (16 // 8),
    )

    key = jax.random.PRNGKey(0)
    pkey, xkey = jax.random.split(key)
    params = init_params(pkey, cfg)

    B_orig, T = 2, 2
    x = jax.random.normal(
        xkey, (B_orig, cfg["in_chans"], T, cfg["img_size"], cfg["img_size"]),
        jnp.float32)

    # boolean patch mask (True = masked); same #masked per frame so the
    # reshape(B, -1, C) in the reference forward is well-defined.
    mask_np = np.zeros((B_orig, T, cfg["num_patches"]), dtype=bool)
    mask_np[..., 1] = True
    mask_np[..., 3] = True
    mask = jnp.asarray(mask_np)

    out = forward(params, x, mask, cfg)
    out = jax.block_until_ready(out)

    n_msk_per_frame = 2
    expected = (B_orig, T * n_msk_per_frame, cfg["dec_num_classes"])
    assert out.shape == expected, (out.shape, expected)
    assert bool(jnp.all(jnp.isfinite(out)))
    print("KERNEL_OK")
</pallas_src>

<mosaic_0001>
module attributes {stable_mosaic.version = 11 : i64} {
  func.func @kernel(%arg0: i32, %arg1: memref<2x4x192xf32, #tpu.memory_space<vmem>>, %arg2: memref<192x128xbf16, #tpu.memory_space<vmem>>, %arg3: memref<4x128xf32, #tpu.memory_space<vmem>>, %arg4: memref<1x128xf32, #tpu.memory_space<vmem>>, %arg5: memref<2x5x128xbf16, #tpu.memory_space<vmem>>) attributes {dimension_semantics = [#tpu.dimension_semantics<parallel>], iteration_bounds = array<i64: 2>, scalar_prefetch = 0 : i64, scratch_operands = 0 : i64, tpu.core_type = #tpu.core_type<tc>, window_params = [{transform_indices = @transform_0, window_bounds = array<i64: 2, 4, 192>}, {pipeline_mode = #tpu.pipeline_mode<synchronous>, transform_indices = @transform_1, window_bounds = array<i64: 192, 128>}, {pipeline_mode = #tpu.pipeline_mode<synchronous>, transform_indices = @transform_2, window_bounds = array<i64: 4, 128>}, {pipeline_mode = #tpu.pipeline_mode<synchronous>, transform_indices = @transform_3, window_bounds = array<i64: 1, 128>}, {transform_indices = @transform_4, window_bounds = array<i64: 2, 5, 128>}]} {
    %c0 = arith.constant 0 : index
    %c0_0 = arith.constant 0 : index
    %c0_1 = arith.constant 0 : index
    %0 = vector.load %arg1[%c0, %c0_0, %c0_1] : memref<2x4x192xf32, #tpu.memory_space<vmem>>, vector<2x4x192xf32>
    %1 = vector.shape_cast %0 : vector<2x4x192xf32> to vector<8x192xf32>
    %2 = arith.truncf %1 : vector<8x192xf32> to vector<8x192xbf16>
    %c0_2 = arith.constant 0 : index
    %c0_3 = arith.constant 0 : index
    %3 = vector.load %arg2[%c0_2, %c0_3] : memref<192x128xbf16, #tpu.memory_space<vmem>>, vector<192x128xbf16>
    %cst = arith.constant dense<0.000000e+00> : vector<8x128xf32>
    %4 = tpu.matmul %2, %3, %cst {dimension_numbers = #tpu.dot_dimension_numbers<[1], [0], [0], [1], [0, 0, 1, 1], [], []>} : vector<8x192xbf16>, vector<192x128xbf16>, vector<8x128xf32> -> vector<8x128xf32>
    %5 = vector.shape_cast %4 : vector<8x128xf32> to vector<2x4x128xf32>
    %c0_4 = arith.constant 0 : index
    %c0_5 = arith.constant 0 : index
    %6 = vector.load %arg3[%c0_4, %c0_5] : memref<4x128xf32, #tpu.memory_space<vmem>>, vector<4x128xf32>
    %7 = vector.shape_cast %6 : vector<4x128xf32> to vector<1x4x128xf32>
    %8 = vector.broadcast %7 : vector<1x4x128xf32> to vector<2x4x128xf32>
    %9 = arith.addf %5, %8 : vector<2x4x128xf32>
    %10 = arith.truncf %9 : vector<2x4x128xf32> to vector<2x4x128xbf16>
    %c0_6 = arith.constant 0 : index
    %c1 = arith.constant 1 : index
    %c0_7 = arith.constant 0 : index
    %11 = vector.load %arg5[%c0_6, %c1, %c0_7] : memref<2x5x128xbf16, #tpu.memory_space<vmem>>, vector<2x4x128xbf16>
    tpu.vector_store %arg5[%c0_6, %c1, %c0_7], %10 {strides = array<i32>} : memref<2x5x128xbf16, #tpu.memory_space<vmem>>, vector<2x4x128xbf16>,
    %c0_8 = arith.constant 0 : index
    %c0_9 = arith.constant 0 : index
    %12 = vector.load %arg4[%c0_8, %c0_9] : memref<1x128xf32, #tpu.memory_space<vmem>>, vector<1x128xf32>
    %13 = vector.shape_cast %12 : vector<1x128xf32> to vector<1x1x128xf32>
    %14 = vector.broadcast %13 : vector<1x1x128xf32> to vector<2x1x128xf32>
    %15 = arith.truncf %14 : vector<2x1x128xf32> to vector<2x1x128xbf16>
    %c0_10 = arith.constant 0 : index
    %c0_11 = arith.constant 0 : index
    %c0_12 = arith.constant 0 : index
    %16 = vector.load %arg5[%c0_10, %c0_11, %c0_12] : memref<2x5x128xbf16, #tpu.memory_space<vmem>>, vector<2x1x128xbf16>
    tpu.vector_store %arg5[%c0_10, %c0_11, %c0_12], %15 {strides = array<i32>} : memref<2x5x128xbf16, #tpu.memory_space<vmem>>, vector<2x1x128xbf16>,
    return
  }
  func.func @transform_0(%arg0: i32) -> (i32, i32, i32) {
    %c0_i32 = arith.constant 0 : i32
    %c0_i32_0 = arith.constant 0 : i32
    %c0_i32_1 = arith.constant 0 : i32
    return %arg0, %c0_i32, %c0_i32_0 : i32, i32, i32
  }
  func.func @transform_1(%arg0: i32) -> (i32, i32) {
    %c0_i32 = arith.constant 0 : i32
    %c0_i32_0 = arith.constant 0 : i32
    %c0_i32_1 = arith.constant 0 : i32
    return %c0_i32, %c0_i32_0 : i32, i32
  }
  func.func @transform_2(%arg0: i32) -> (i32, i32) {
    %c0_i32 = arith.constant 0 : i32
    %c0_i32_0 = arith.constant 0 : i32
    %c0_i32_1 = arith.constant 0 : i32
    return %c0_i32, %c0_i32_0 : i32, i32
  }
  func.func @transform_3(%arg0: i32) -> (i32, i32) {
    %c0_i32 = arith.constant 0 : i32
    %c0_i32_0 = arith.constant 0 : i32
    %c0_i32_1 = arith.constant 0 : i32
    return %c0_i32, %c0_i32_0 : i32, i32
  }
  func.func @transform_4(%arg0: i32) -> (i32, i32, i32) {
    %c0_i32 = arith.constant 0 : i32
    %c0_i32_0 = arith.constant 0 : i32
    %c0_i32_1 = arith.constant 0 : i32
    return %arg0, %c0_i32, %c0_i32_0 : i32, i32, i32
  }
}

</mosaic_0001>

<llo_original>
// kernel: tpu_custom_call.1
$region0: #{tpu_custom_call.1}
  #allocation0 [shape = 'u32[]', space=smem, size = 0x4, offset = 0x4, fixed_abs, tag = 'smem constant byte address 0x4 - core index']
  #allocation1 [shape = 'u32[144,128]{1,0:T(1,128)}', space=vmem, size = 0x12000, scoped, tag = 'internal scratch']
  %s0 = inlined_call_operand.hbm [shape: f32[4,4,192], index: 0, kind: input, shape index: {}]
  %s1 = inlined_call_operand.hbm [shape: bf16[192,128], index: 1, kind: input, shape index: {}]
  %s2 = inlined_call_operand.hbm [shape: f32[4,128], index: 2, kind: input, shape index: {}]
  %s3 = inlined_call_operand.vmem [shape: f32[1,128], index: 3, kind: input, shape index: {}]
  %s4 = inlined_call_operand.vmem [shape: bf16[4,5,128], index: 4, kind: output, shape index: {}]
  %s5 = sld [smem:[#allocation0]]
  $region61: #{tpu_custom_call.1} parent=0
    _
  %s7 = ssub.s32 1, %s5
  %s8 = scalar_select 0, %s7, %s5
  $region1: #{tpu_custom_call.1} parent=0
    #allocation2 [shape = 'u8[16384]{0}', space=vmem, size = 0x4000, scoped, tag = 'input window, operand 0']
    #allocation3 [shape = 's32[2]{0}', space=sflag, size = 0x8, scoped, tag = 'scoped memory for tpu_custom_call.1']
    #allocation4 [shape = 'u8[49152]{0}', space=vmem, size = 0xc000, scoped, tag = 'input window, operand 1, single buffered']
    #allocation5 [shape = 's32[1]{0}', space=sflag, size = 0x4, scoped, tag = 'scoped memory for tpu_custom_call.1']
    #allocation6 [shape = 'u8[2048]{0}', space=vmem, size = 0x800, scoped, tag = 'input window, operand 2, single buffered']
    %9 = vsyncpa [#allocation3], 0
    %s10 = scalar_lea.sflag [#allocation3], 1
    %11 = vsyncpa %s10, 0
    %12 = vsyncpa [#allocation5], 0
    loop: start=0, step=1, limit=4
    $region2: #{tpu_custom_call.1} parent=1 // loop_pre_header
      _
    $region3: #{tpu_custom_call.1} parent=1 // loop_header
      %s14 = sphi 0, %s18
      %p15 = scmp.ge.s32.totalorder %s14, 4
      %s24 = sphi 0, %s26
      %s27 = sphi 0, %s24
      %s28 = sphi 0, %s27
      %s44 = sphi 0, %s28
      %s48 = sphi 0, %s48
      %s50 = sphi 0, %s48
      %s51 = sphi 0, %s50
      %s65 = sphi 0, %s51
      %s69 = sphi 0, %s69
      %s71 = sphi 0, %s69
      %s72 = sphi 0, %s71
      %s86 = sphi 0, %s72
      %s90 = sphi 0, %s90
      %s92 = sphi 0, %s90
      %s93 = sphi 0, %s92
      %s107 = sphi 0, %s93
      %s113 = sphi 0, %s115
      %s116 = sphi 0, %s113
      %s117 = sphi 0, %s116
      %s133 = sphi 0, %s117
    $region4: #{tpu_custom_call.1} parent=1 // loop_header_branch
      %17 = sbr.rel (%p15) target = $region8
    $region5: #{tpu_custom_call.1} parent=1 // loop_body
      %s19 = ssub.s32 %s14, 1
      %s20 = ssub.s32 %s14, 2
      %s21 = sadd.s32 %s14, 1
      %s22 = ssub.s32 %s14, %s21
      %p23 = scmp.eq.s32.totalorder %s22, 0
      %s25 = sadd.s32 %s24, 1
      %s26 = scalar_select %p23, %s24, %s25
      %p29 = pneg %p23
      %p30 = scmp.eq.s32.totalorder %s14, 1
      %p31 = por %p29, %p30
      %p32 = scmp.ne.s32.totalorder %s24, %s27
      %p33 = scmp.eq.s32.totalorder %s14, 0
      %p34 = por %p32, %p33
      %p35 = scmp.ne.s32.totalorder %s24, %s27
      %p36 = scmp.eq.s32.totalorder %s19, 1
      %p37 = por %p35, %p36
      %p38 = scmp.ne.s32.totalorder %s27, %s28
      %p39 = scmp.eq.s32.totalorder %s19, 0
      %p40 = por %p38, %p39
      %p41 = scmp.ne.s32.totalorder %s27, %s28
      %p42 = scmp.eq.s32.totalorder %s20, 1
      %p43 = por %p41, %p42
      %p45 = scmp.ne.s32.totalorder %s28, %s44
      %p46 = scmp.eq.s32.totalorder %s20, 0
      %p47 = por %p45, %p46
      %s49 = sadd.s32 %s48, 1
      %p52 = scmp.eq.s32.totalorder %s14, 1
      %p53 = scmp.ne.s32.totalorder %s48, %s50
      %p54 = scmp.eq.s32.totalorder %s14, 0
      %p55 = por %p53, %p54
      %p56 = scmp.ne.s32.totalorder %s48, %s50
      %p57 = scmp.eq.s32.totalorder %s19, 1
      %p58 = por %p56, %p57
      %p59 = scmp.ne.s32.totalorder %s50, %s51
      %p60 = scmp.eq.s32.totalorder %s19, 0
      %p61 = por %p59, %p60
      %p62 = scmp.ne.s32.totalorder %s50, %s51
      %p63 = scmp.eq.s32.totalorder %s20, 1
      %p64 = por %p62, %p63
      %p66 = scmp.ne.s32.totalorder %s51, %s65
      %p67 = scmp.eq.s32.totalorder %s20, 0
      %p68 = por %p66, %p67
      %s70 = sadd.s32 %s69, 1
      %p73 = scmp.eq.s32.totalorder %s14, 1
      %p74 = scmp.ne.s32.totalorder %s69, %s71
      %p75 = scmp.eq.s32.totalorder %s14, 0
      %p76 = por %p74, %p75
      %p77 = scmp.ne.s32.totalorder %s69, %s71
      %p78 = scmp.eq.s32.totalorder %s19, 1
      %p79 = por %p77, %p78
      %p80 = scmp.ne.s32.totalorder %s71, %s72
      %p81 = scmp.eq.s32.totalorder %s19, 0
      %p82 = por %p80, %p81
      %p83 = scmp.ne.s32.totalorder %s71, %s72
      %p84 = scmp.eq.s32.totalorder %s20, 1
      %p85 = por %p83, %p84
      %p87 = scmp.ne.s32.totalorder %s72, %s86
      %p88 = scmp.eq.s32.totalorder %s20, 0
      %p89 = por %p87, %p88
      %s91 = sadd.s32 %s90, 1
      %p94 = scmp.eq.s32.totalorder %s14, 1
      %p95 = scmp.ne.s32.totalorder %s90, %s92
      %p96 = scmp.eq.s32.totalorder %s14, 0
      %p97 = por %p95, %p96
      %p98 = scmp.ne.s32.totalorder %s90, %s92
      %p99 = scmp.eq.s32.totalorder %s19, 1
      %p100 = por %p98, %p99
      %p101 = scmp.ne.s32.totalorder %s92, %s93
      %p102 = scmp.eq.s32.totalorder %s19, 0
      %p103 = por %p101, %p102
      %p104 = scmp.ne.s32.totalorder %s92, %s93
      %p105 = scmp.eq.s32.totalorder %s20, 1
      %p106 = por %p104, %p105
      %p108 = scmp.ne.s32.totalorder %s93, %s107
      %p109 = scmp.eq.s32.totalorder %s20, 0
      %p110 = por %p108, %p109
      %s111 = ssub.s32 %s14, %s21
      %p112 = scmp.eq.s32.totalorder %s111, 0
      %s114 = sadd.s32 %s113, 1
      %s115 = scalar_select %p112, %s113, %s114
      %p118 = pneg %p112
      %p119 = scmp.eq.s32.totalorder %s14, 1
      %p120 = por %p118, %p119
      %p121 = scmp.ne.s32.totalorder %s113, %s116
      %p122 = scmp.eq.s32.totalorder %s14, 0
      %p123 = por %p121, %p122
      %p124 = scmp.ne.s32.totalorder %s113, %s116
      %p125 = scmp.eq.s32.totalorder %s19, 1
      %p126 = por %p124, %p125
      %p127 = scmp.ne.s32.totalorder %s116, %s117
      %p128 = scmp.eq.s32.totalorder %s19, 0
      %p129 = por %p127, %p128
      %p130 = scmp.ne.s32.totalorder %s116, %s117
      %p131 = scmp.eq.s32.totalorder %s20, 1
      %p132 = por %p130, %p131
      %p134 = scmp.ne.s32.totalorder %s117, %s133
      %p135 = scmp.eq.s32.totalorder %s20, 0
      %p136 = por %p134, %p135
      %p137 = scmp.le.s32.totalorder 1, %s14
      %p138 = scmp.lt.s32.totalorder %s14, 3
      %p139 = pnand %p137, %p138
      %p140 = pneg %p139
      // Predicated region
      $region9: #{tpu_custom_call.1} parent=5 // pred_check
        _
      $region10: #{tpu_custom_call.1} parent=5 // pred_check_branch
        %142 = sbr.rel (%p139) target = $region12
      $region11: #{tpu_custom_call.1} parent=5 // pred_region
        %s143 = ssub.s32 %s14, 1
        // Predicated region
        $region13: #{tpu_custom_call.1} parent=11 // pred_check
          %p144 = pneg %p61
        $region14: #{tpu_custom_call.1} parent=11 // pred_check_branch
          %146 = sbr.rel (%p144) target = $region16
        $region15: #{tpu_custom_call.1} parent=11 // pred_region
          %s148 = ssub.s32 1536, 1536
          %149 = vsyncadd [#allocation5], %s148
          %s150 = sshll.u32 [#allocation4], 4
          %s151 = int_to_ptr.vmem [resolvable:$true] %s150
          %156 = dma.hbm_to_vmem [thread:$0]  %s1, 1536, %s151, [#allocation5], 64, 64, 4
        $region16: #{tpu_custom_call.1} parent=11 // pred_fallthru
          _
        // Predicated region
        $region17: #{tpu_custom_call.1} parent=11 // pred_check
          %p157 = pneg %p82
        $region18: #{tpu_custom_call.1} parent=11 // pred_check_branch
          %159 = sbr.rel (%p157) target = $region20
        $region19: #{tpu_custom_call.1} parent=11 // pred_region
          %s161 = ssub.s32 64, 64
          %162 = vsyncadd [#allocation5], %s161
          %s164 = sshll.u32 [#allocation6], 4
          %s165 = int_to_ptr.vmem [resolvable:$true] %s164
          %167 = dma.hbm_to_vmem [thread:$0]  %s2, 64, %s165, [#allocation5]
        $region20: #{tpu_custom_call.1} parent=11 // pred_fallthru
          _
        // Predicated region
        $region21: #{tpu_custom_call.1} parent=11 // pred_check
          %p168 = pneg %p103
        $region22: #{tpu_custom_call.1} parent=11 // pred_check_branch
          %170 = sbr.rel (%p168) target = $region24
        $region23: #{tpu_custom_call.1} parent=11 // pred_region
          _
        $region24: #{tpu_custom_call.1} parent=11 // pred_fallthru
          _
      $region12: #{tpu_custom_call.1} parent=5 // pred_fallthru
        _
      %p171 = scmp.lt.s32.totalorder %s14, 2
      // Predicated region
      $region25: #{tpu_custom_call.1} parent=5 // pred_check
        %p172 = pneg %p171
      $region26: #{tpu_custom_call.1} parent=5 // pred_check_branch
        %174 = sbr.rel (%p172) target = $region28
      $region27: #{tpu_custom_call.1} parent=5 // pred_region
        // Predicated region
        $region29: #{tpu_custom_call.1} parent=27 // pred_check
          %p175 = pneg %p34
        $region30: #{tpu_custom_call.1} parent=27 // pred_check_branch
          %177 = sbr.rel (%p175) target = $region32
        $region31: #{tpu_custom_call.1} parent=27 // pred_region
          %s178 = sand.u32 %s24, 1
          %s179 = scalar_lea.sflag [#allocation3], %s178
          %s180 = sand.u32 %s24, 1
          %s181 = smul.addr %s180, 16
          %s182 = scalar_lea.vmem [#allocation2], %s181
          %s183 = smul.u32 2, %s14
          %s185 = ssub.s32 256, 256
          %186 = vsyncadd %s179, %s185
          %s187 = smul.addr %s183, 2
          %s188 = smul.addr %s187, 64
          %s189 = scalar_lea.hbm %s0, %s188
          %s190 = sshll.u32 %s182, 4
          %s191 = int_to_ptr.vmem [resolvable:$true] %s190
          %196 = dma.hbm_to_vmem [thread:$0]  %s189, 256, %s191, %s179, 128, 128, 8
        $region32: #{tpu_custom_call.1} parent=27 // pred_fallthru
          _
      $region28: #{tpu_custom_call.1} parent=5 // pred_fallthru
        _
      %p197 = scmp.le.s32.totalorder 1, %s14
      %p198 = scmp.lt.s32.totalorder %s14, 3
      %p199 = pnand %p197, %p198
      %p200 = pneg %p199
      // Predicated region
      $region33: #{tpu_custom_call.1} parent=5 // pred_check
        _
      $region34: #{tpu_custom_call.1} parent=5 // pred_check_branch
        %202 = sbr.rel (%p199) target = $region36
      $region35: #{tpu_custom_call.1} parent=5 // pred_region
        %s203 = ssub.s32 %s14, 1
        %s204 = sand.u32 %s27, 1
        %s205 = scalar_lea.sflag [#allocation3], %s204
        %s206 = sand.u32 %s27, 1
        %s207 = smul.addr %s206, 16
        %s208 = scalar_lea.vmem [#allocation2], %s207
        // Predicated region
        $region37: #{tpu_custom_call.1} parent=35 // pred_check
          %p209 = pneg %p40
        $region38: #{tpu_custom_call.1} parent=35 // pred_check_branch
          %211 = sbr.rel (%p209) target = $region40
        $region39: #{tpu_custom_call.1} parent=35 // pred_region
          %212 = dma.done %s205, 256
        $region40: #{tpu_custom_call.1} parent=35 // pred_fallthru
          _
        // Predicated region
        $region41: #{tpu_custom_call.1} parent=35 // pred_check
          %p213 = pneg %p61
        $region42: #{tpu_custom_call.1} parent=35 // pred_check_branch
          %215 = sbr.rel (%p213) target = $region44
        $region43: #{tpu_custom_call.1} parent=35 // pred_region
          %216 = dma.done [#allocation5], 1536
        $region44: #{tpu_custom_call.1} parent=35 // pred_fallthru
          _
        // Predicated region
        $region45: #{tpu_custom_call.1} parent=35 // pred_check
          %p217 = pneg %p82
        $region46: #{tpu_custom_call.1} parent=35 // pred_check_branch
          %219 = sbr.rel (%p217) target = $region48
        $region47: #{tpu_custom_call.1} parent=35 // pred_region
          %220 = dma.done [#allocation5], 64
        $region48: #{tpu_custom_call.1} parent=35 // pred_fallthru
          _
        %s221 = sand.u32 %s27, 1
        %s222 = scalar_lea.sflag [#allocation3], %s221
        %s223 = sand.u32 %s27, 1
        %s224 = smul.addr %s223, 16
        %s225 = scalar_lea.vmem [#allocation2], %s224
        %p226 = pneg %p40
        %p227 = pneg %p37
        %p228 = pneg %p61
        %p229 = pneg %p58
        %p230 = pneg %p82
        %p231 = pneg %p79
        %p232 = pneg %p103
        %p233 = pneg %p100
        %p234 = pneg %p129
        %p235 = pneg %p126
        %s236 = smul.u32 2, %s19
        %p237 = scmp.lt.s32.totalorder %s236, 3
        %s238 = scalar_select %p237, %s236, 3
        %s239 = smul.addr %s238, 4
        %s240 = scalar_lea.vmem %s4, %s239
        %s241 = smul.u32 2, %s19
        %s242 = smul.u32 2, %s19
        %p243 = scmp.lt.s32.totalorder %s242, 3
        %s244 = scalar_select %p243, %s242, 3
        %s245 = smul.addr %s244, 4
        %s246 = scalar_lea.vmem %s4, %s245
        %s247 = smul.u32 2, %s19
        %v249 = vld [vmem:[%s208] sm:$0xff]
        %v250 = vld [vmem:[%s208 + $0x8] sm:$0xff]
        %v253 = vcombine.low %v249, %v250
        %v254 = vcombine.high %v249, %v250
        %v257 = vpack.c.bf16 %v253, %v253
        %v258 = vpack.c.bf16 %v254, %v254
        %v259 = vld [vmem:[#allocation4] sm:$0xf]
        %v260 = vld [vmem:[#allocation4 + $0x4] sm:$0xf]
        %v261 = vld [vmem:[#allocation4 + $0x8] sm:$0xf]
        %v262 = vld [vmem:[#allocation4 + $0xc] sm:$0xf]
        %v263 = vld [vmem:[#allocation4 + $0x10] sm:$0xf]
        %v264 = vld [vmem:[#allocation4 + $0x14] sm:$0xf]
        %v265 = vld [vmem:[#allocation4 + $0x18] sm:$0xf]
        %v266 = vld [vmem:[#allocation4 + $0x1c] sm:$0xf]
        %v267 = vld [vmem:[#allocation4 + $0x20] sm:$0xf]
        %v268 = vld [vmem:[#allocation4 + $0x24] sm:$0xf]
        %v269 = vld [vmem:[#allocation4 + $0x28] sm:$0xf]
        %v270 = vld [vmem:[#allocation4 + $0x2c] sm:$0xf]
        %v271 = vld [vmem:[#allocation4 + $0x30] sm:$0xf]
        %v272 = vld [vmem:[#allocation4 + $0x34] sm:$0xf]
        %v273 = vld [vmem:[#allocation4 + $0x38] sm:$0xf]
        %v274 = vld [vmem:[#allocation4 + $0x3c] sm:$0xf]
        %v275 = vld [vmem:[#allocation4 + $0x40] sm:$0xf]
        %v276 = vld [vmem:[#allocation4 + $0x44] sm:$0xf]
        %v277 = vld [vmem:[#allocation4 + $0x48] sm:$0xf]
        %v278 = vld [vmem:[#allocation4 + $0x4c] sm:$0xf]
        %v279 = vld [vmem:[#allocation4 + $0x50] sm:$0xf]
        %v280 = vld [vmem:[#allocation4 + $0x54] sm:$0xf]
        %v281 = vld [vmem:[#allocation4 + $0x58] sm:$0xf]
        %v282 = vld [vmem:[#allocation4 + $0x5c] sm:$0xf]
        %v307 = vunpack.c.l.b16 %v259
        %v308 = vunpack.c.l.b16 %v260
        %v309 = vunpack.c.l.b16 %v261
        %v310 = vunpack.c.l.b16 %v262
        %v311 = vunpack.c.l.b16 %v263
        %v312 = vunpack.c.l.b16 %v264
        %v313 = vunpack.c.l.b16 %v265
        %v314 = vunpack.c.l.b16 %v266
        %v315 = vunpack.c.l.b16 %v267
        %v316 = vunpack.c.l.b16 %v268
        %v317 = vunpack.c.l.b16 %v269
        %v318 = vunpack.c.l.b16 %v270
        %v319 = vunpack.c.l.b16 %v271
        %v320 = vunpack.c.l.b16 %v272
        %v321 = vunpack.c.l.b16 %v273
        %v322 = vunpack.c.l.b16 %v274
        %v323 = vunpack.c.l.b16 %v275
        %v324 = vunpack.c.l.b16 %v276
        %v325 = vunpack.c.l.b16 %v277
        %v326 = vunpack.c.l.b16 %v278
        %v327 = vunpack.c.l.b16 %v279
        %v328 = vunpack.c.l.b16 %v280
        %v329 = vunpack.c.l.b16 %v281
        %v330 = vunpack.c.l.b16 %v282
        %v331 = vpack.c.b16 %v308, %v307
        %v332 = vpack.c.b16 %v310, %v309
        %v333 = vpack.c.b16 %v312, %v311
        %v334 = vpack.c.b16 %v314, %v313
        %v335 = vpack.c.b16 %v316, %v315
        %v336 = vpack.c.b16 %v318, %v317
        %v337 = vpack.c.b16 %v320, %v319
        %v338 = vpack.c.b16 %v322, %v321
        %v339 = vpack.c.b16 %v324, %v323
        %v340 = vpack.c.b16 %v326, %v325
        %v341 = vpack.c.b16 %v328, %v327
        %v342 = vpack.c.b16 %v330, %v329
        %vm355 = vcmask 523264
        %v357 = vsel %vm355, %v258, 0
        %359 = vmatprep.subr.bf16.mxu0 0
        %360 = vmatpush1.bf16.msra.mxu0 %v338
        %361 = vmatprep.subr.bf16.mxu0 0
        %362 = vmatpush1.bf16.msra.mxu0 %v337
        %363 = vmatprep.subr.bf16.mxu0 0
        %364 = vmatpush1.bf16.msra.mxu0 %v336
        %365 = vmatprep.subr.bf16.mxu0 0
        %366 = vmatpush1.bf16.msra.mxu0 %v335
        %367 = vmatprep.subr.bf16.mxu0 0
        %368 = vmatpush1.bf16.msra.mxu0 %v334
        %369 = vmatprep.subr.bf16.mxu0 0
        %370 = vmatpush1.bf16.msra.mxu0 %v333
        %371 = vmatprep.subr.bf16.mxu0 0
        %372 = vmatpush1.bf16.msra.mxu0 %v332
        %373 = vmatprep.subr.bf16.mxu0 0
        %374 = vmatpush1.bf16.msra.mxu0 %v331
        %375 = vmatprep.subr.bf16.mxu0 0
        %376 = vmatpush2.bf16.msra.mxu0 0
        %377 = vmatprep.subr.bf16.mxu0 0
        %378 = vmatpush2.bf16.msra.mxu0 0
        %379 = vmatprep.subr.bf16.mxu0 0
        %380 = vmatpush2.bf16.msra.mxu0 0
        %381 = vmatprep.subr.bf16.mxu0 0
        %382 = vmatpush2.bf16.msra.mxu0 0
        %383 = vmatprep.subr.bf16.mxu0 0
        %384 = vmatpush2.bf16.msra.mxu0 %v342
        %385 = vmatprep.subr.bf16.mxu0 0
        %386 = vmatpush2.bf16.msra.mxu0 %v341
        %387 = vmatprep.subr.bf16.mxu0 0
        %388 = vmatpush2.bf16.msra.mxu0 %v340
        %389 = vmatprep.subr.bf16.mxu0 0
        %390 = vmatpush2.bf16.msra.mxu0 %v339
        %391 = vmatprep.mubr.bf16.mxu0 %v357
        %392 = vmatmul.mubr.bf16.gmra.mxu0 %v257
        %v393 = vpop.f32.mrf.mxu0
        %v394 = vadd.f32 0.0, %v393
        %v395 = vpop.f32.mrf.mxu0
        %v396 = vpop.f32.mrf.mxu0
        %v397 = vpop.f32.mrf.mxu0
        %398 = vdwg.mxu0
        %v400 = vcombine.high %v394, %v394
        %v402 = vld [vmem:[#allocation6] sm:$0xf]
        %v403 = vadd.f32 %v394, %v402
        %v404 = vadd.f32 %v400, %v402
        %v405 = vpack.c.bf16 %v403, %v403
        %v406 = vpack.c.bf16 %v404, %v404
        %v409 = vunpack.c.l.b16 %v405
        %v410 = vunpack.c.l.b16 %v406
        %v411 = vpack.c.b16 %v409, %v409
        %v412 = vpack.c.b16 %v410, %v410
        %v414 = vshrl.u32 %v411, 16
        %v416 = vrot.slane %v414, 7
        %v417 = vshll.u32 %v411, 16
        %v419 = vor.u32 %v416, %v417
        %v421 = vshrl.u32 %v412, 16
        %v423 = vrot.slane %v421, 7
        %v424 = vshll.u32 %v412, 16
        %v426 = vor.u32 %v423, %v424
        %vm429 = vcmask 1042432
        %vm430 = vsmask.f32 2306
        %vm431 = vmand %vm429, %vm430
        %v432 = vld [vmem:[%s246] sm:$0x7]
        %v433 = vsel %vm431, %v419, %v432
        %434 = vst [vmem:[%s246] sm:$0x7] %v433
        %v435 = vld [vmem:[%s246 + $0x4] sm:$0x7]
        %v436 = vsel %vm431, %v426, %v435
        %437 = vst [vmem:[%s246 + $0x4] sm:$0x7] %v436
        %v438 = vld [vmem:[%s3] sm:$0x1]
        %v439 = vpack.c.bf16 %v438, %v438
        %vm440 = vcmask 1040384
        %vm441 = vsmask.f32 256
        %vm442 = vmand %vm440, %vm441
        %v443 = vld [vmem:[%s246] sm:$0x1]
        %v444 = vsel %vm442, %v439, %v443
        %445 = vst [vmem:[%s246] sm:$0x1] %v444
        %v446 = vld [vmem:[%s246 + $0x4] sm:$0x1]
        %v447 = vsel %vm442, %v439, %v446
        %448 = vst [vmem:[%s246 + $0x4] sm:$0x1] %v447
        %s449 = smul.u32 2, %s19
        %p450 = scmp.lt.s32.totalorder %s449, 3
        %s451 = scalar_select %p450, %s449, 3
        %s452 = smul.addr %s451, 4
        %s453 = scalar_lea.vmem %s4, %s452
        // Predicated region
        $region49: #{tpu_custom_call.1} parent=35 // pred_check
          %p454 = pneg %p126
        $region50: #{tpu_custom_call.1} parent=35 // pred_check_branch
          %456 = sbr.rel (%p454) target = $region52
        $region51: #{tpu_custom_call.1} parent=35 // pred_region
          %s457 = smul.u32 2, %s19
        $region52: #{tpu_custom_call.1} parent=35 // pred_fallthru
          _
      $region36: #{tpu_custom_call.1} parent=5 // pred_fallthru
        _
      %p458 = scmp.le.s32.totalorder 2, %s14
      // Predicated region
      $region53: #{tpu_custom_call.1} parent=5 // pred_check
        %p459 = pneg %p458
      $region54: #{tpu_custom_call.1} parent=5 // pred_check_branch
        %461 = sbr.rel (%p459) target = $region56
      $region55: #{tpu_custom_call.1} parent=5 // pred_region
        %s462 = ssub.s32 %s14, 2
        // Predicated region
        $region57: #{tpu_custom_call.1} parent=55 // pred_check
          %p463 = pneg %p132
        $region58: #{tpu_custom_call.1} parent=55 // pred_check_branch
          %465 = sbr.rel (%p463) target = $region60
        $region59: #{tpu_custom_call.1} parent=55 // pred_region
          %s466 = smul.u32 2, %s20
          %p467 = scmp.lt.s32.totalorder %s466, 3
          %s468 = scalar_select %p467, %s466, 3
          %s469 = smul.addr %s468, 4
          %s470 = scalar_lea.vmem %s4, %s469
        $region60: #{tpu_custom_call.1} parent=55 // pred_fallthru
          _
      $region56: #{tpu_custom_call.1} parent=5 // pred_fallthru
        _
    $region6: #{tpu_custom_call.1} parent=1 // loop_footer
      %s18 = sadd.s32 1, %s14
    $region7: #{tpu_custom_call.1} parent=1 // loop_footer_branch
      %13 = sbr.rel target = $region3
    $region8: #{tpu_custom_call.1} parent=1 // loop_exit
      _
    %471 = vsyncpa [#allocation3], 1
    %s472 = scalar_lea.sflag [#allocation3], 1
    %473 = vsyncpa %s472, 1
    %474 = vsyncpa [#allocation5], 1

</llo_original>
